<compile_context>
chip_gen: v5e
topology: v5e:2x2
jax: 0.10.0
libtpu: 0.0.40
codegen_flags: <defaults>
</compile_context>

<pallas_src>
import functools

import jax
import jax.numpy as jnp
from jax.experimental import pallas as pl
from jax.experimental.pallas import tpu as pltpu

EPS = 1e-5  # torch.nn.LayerNorm default


def _round_up(n: int, m: int) -> int:
    return ((n + m - 1) // m) * m


def prenorm_kernel(x_ref, wt_ref, b_ref, o_ref, *, inv_d):
    # LayerNorm (no affine: folded into the weight) in f32, then Linear on MXU.
    x = x_ref[...].astype(jnp.float32)                       # (Tm, Dp)
    s = jnp.sum(x, axis=-1, keepdims=True)
    ss = jnp.sum(x * x, axis=-1, keepdims=True)
    mean = s * inv_d
    var = jnp.maximum(ss * inv_d - mean * mean, 0.0)
    xn = (x - mean) * jax.lax.rsqrt(var + EPS)                # (Tm, Dp)
    # Matmul in the weight's native dtype; f32 accumulation on the MXU.
    y = jnp.dot(xn.astype(wt_ref.dtype), wt_ref[...],
                preferred_element_type=jnp.float32)
    y = y + b_ref[...]                                        # bias kept in f32
    o_ref[...] = y.astype(o_ref.dtype)


def prenorm_linear(x, gamma, beta, w, b, *, row_tile=256):
    """Fused LayerNorm(dim) -> Linear(dim, dim_out).

    x: (B, S, D); gamma/beta: (D,); w: (D_out, D_in) torch-style; b: (D_out,).
    Returns (B, S, D_out) in x.dtype.
    """
    B, S, D = x.shape
    D_out, D_in = w.shape
    assert D_in == D
    tokens = B * S

    # ---- fold LayerNorm affine into the Linear weights (wrapper-side, once) --
    wt_f32 = w.T.astype(jnp.float32)                                  # (D, D_out)
    wt = (wt_f32 * gamma.astype(jnp.float32)[:, None]).astype(w.dtype)
    b_fold = (beta.astype(jnp.float32) @ wt_f32) + b.astype(jnp.float32)

    # ---- pad to lane/sublane friendly shapes ---------------------------------
    D_pad = _round_up(D, 128)
    Dout_pad = _round_up(D_out, 128)
    row_tile = max(16, min(int(row_tile), _round_up(tokens, 16)))
    tokens_pad = _round_up(tokens, row_tile)

    x2 = jnp.pad(x.reshape(tokens, D),
                 ((0, tokens_pad - tokens), (0, D_pad - D)))
    wt_p = jnp.pad(wt, ((0, D_pad - D), (0, Dout_pad - D_out)))
    b_p = jnp.pad(b_fold, ((0, Dout_pad - D_out),)).reshape(1, Dout_pad)

    # ---- choose an output-column tile that fits a v7x-safe VMEM budget -------
    w_itemsize = jnp.dtype(wt_p.dtype).itemsize
    x_itemsize = jnp.dtype(x2.dtype).itemsize
    max_cols = max(128, ((24 * 1024 * 1024) // (2 * D_pad * w_itemsize)) // 128 * 128)
    col_tile = min(Dout_pad, max_cols)
    n_row_blocks = tokens_pad // row_tile
    n_col_blocks = Dout_pad // col_tile

    # VMEM budget (double-buffered blocks) + margin, clamped to sane limits.
    vmem_need = (2 * row_tile * D_pad * x_itemsize
                 + 2 * D_pad * col_tile * w_itemsize
                 + 2 * col_tile * 4
                 + 2 * row_tile * col_tile * x_itemsize)
    vmem_limit = min(100 * 1024 * 1024, max(32 * 1024 * 1024, int(1.5 * vmem_need)))

    cost = pl.CostEstimate(
        flops=2 * tokens_pad * D_pad * Dout_pad + 6 * tokens_pad * D_pad,
        transcendentals=tokens_pad,
        bytes_accessed=(tokens_pad * D_pad * x_itemsize
                        + D_pad * Dout_pad * w_itemsize
                        + tokens_pad * Dout_pad * x_itemsize),
    )

    kernel = functools.partial(prenorm_kernel, inv_d=1.0 / D)

    # Grid: columns outer (weight block resident across the inner row sweep),
    # rows inner (activations streamed).
    out = pl.pallas_call(
        kernel,
        out_shape=jax.ShapeDtypeStruct((tokens_pad, Dout_pad), x.dtype),
        grid_spec=pltpu.PrefetchScalarGridSpec(
            num_scalar_prefetch=0,
            grid=(n_col_blocks, n_row_blocks),
            in_specs=[
                pl.BlockSpec((row_tile, D_pad), lambda j, i: (i, 0)),
                pl.BlockSpec((D_pad, col_tile), lambda j, i: (0, j)),
                pl.BlockSpec((1, col_tile), lambda j, i: (0, j)),
            ],
            out_specs=pl.BlockSpec((row_tile, col_tile), lambda j, i: (i, j)),
        ),
        compiler_params=pltpu.CompilerParams(
            dimension_semantics=("parallel", "parallel"),
            vmem_limit_bytes=vmem_limit,
        ),
        cost_estimate=cost,
    )(x2, wt_p, b_p)

    return out[:tokens, :D_out].reshape(B, S, D_out)


if __name__ == "__main__":
    # TODO(synk): PreNorm is a generic wrapper over arbitrary (norm, fn); this
    # kernel instantiates the standard LayerNorm + Linear(dim, dim) case.
    B, S, D = 2, 8, 32
    key = jax.random.PRNGKey(0)
    kx, kw, kb, kg, kbe = jax.random.split(key, 5)

    x = jax.random.normal(kx, (B, S, D), dtype=jnp.float32)
    # LayerNorm params (non-trivial so the affine fold is exercised).
    gamma = 1.0 + 0.1 * jax.random.normal(kg, (D,), dtype=jnp.float32)
    beta = 0.1 * jax.random.normal(kbe, (D,), dtype=jnp.float32)
    # Linear params, torch-style (out, in).
    w = jax.random.normal(kw, (D, D), dtype=jnp.float32) * 0.02
    b = jax.random.normal(kb, (D,), dtype=jnp.float32) * 0.02

    out = prenorm_linear(x, gamma, beta, w, b)
    out = jax.block_until_ready(out)

    # Pure-JAX reference: LayerNorm (with affine) then Linear.
    mean = jnp.mean(x, axis=-1, keepdims=True)
    var = jnp.mean((x - mean) ** 2, axis=-1, keepdims=True)
    xn = (x - mean) * jax.lax.rsqrt(var + EPS) * gamma + beta
    ref = xn @ w.T + b

    assert out.shape == ref.shape
    assert jnp.allclose(out, ref, atol=1e-4, rtol=1e-4), (
        float(jnp.max(jnp.abs(out - ref))))

    print("KERNEL_OK")
</pallas_src>

<mosaic_0001>
module attributes {stable_mosaic.version = 11 : i64} {
  func.func @prenorm_kernel(%arg0: i32, %arg1: i32, %arg2: memref<16x128xf32, #tpu.memory_space<vmem>>, %arg3: memref<128x128xf32, #tpu.memory_space<vmem>>, %arg4: memref<1x128xf32, #tpu.memory_space<vmem>>, %arg5: memref<16x128xf32, #tpu.memory_space<vmem>>) attributes {dimension_semantics = [#tpu.dimension_semantics<parallel>, #tpu.dimension_semantics<parallel>], iteration_bounds = array<i64: 1, 1>, scalar_prefetch = 0 : i64, scratch_operands = 0 : i64, tpu.core_type = #tpu.core_type<tc>, window_params = [{transform_indices = @transform_0, window_bounds = array<i64: 16, 128>}, {transform_indices = @transform_1, window_bounds = array<i64: 128, 128>}, {transform_indices = @transform_2, window_bounds = array<i64: 1, 128>}, {transform_indices = @transform_3, window_bounds = array<i64: 16, 128>}]} {
    %c0 = arith.constant 0 : index
    %c0_0 = arith.constant 0 : index
    %0 = vector.load %arg2[%c0, %c0_0] : memref<16x128xf32, #tpu.memory_space<vmem>>, vector<16x128xf32>
    %cst = arith.constant dense<0.000000e+00> : vector<16xf32>
    %1 = vector.multi_reduction <add>, %0, %cst [1] : vector<16x128xf32> to vector<16xf32>
    %2 = vector.shape_cast %1 : vector<16xf32> to vector<16x1xf32>
    %3 = arith.mulf %0, %0 : vector<16x128xf32>
    %cst_1 = arith.constant dense<0.000000e+00> : vector<16xf32>
    %4 = vector.multi_reduction <add>, %3, %cst_1 [1] : vector<16x128xf32> to vector<16xf32>
    %5 = vector.shape_cast %4 : vector<16xf32> to vector<16x1xf32>
    %cst_2 = arith.constant 3.125000e-02 : f32
    %6 = vector.broadcast %cst_2 : f32 to vector<16x1xf32>
    %7 = arith.mulf %2, %6 : vector<16x1xf32>
    %cst_3 = arith.constant 3.125000e-02 : f32
    %8 = vector.broadcast %cst_3 : f32 to vector<16x1xf32>
    %9 = arith.mulf %5, %8 : vector<16x1xf32>
    %10 = arith.mulf %7, %7 : vector<16x1xf32>
    %11 = arith.subf %9, %10 : vector<16x1xf32>
    %cst_4 = arith.constant 0.000000e+00 : f32
    %12 = vector.broadcast %cst_4 : f32 to vector<16x1xf32>
    %13 = arith.maximumf %11, %12 : vector<16x1xf32>
    %14 = vector.broadcast %7 : vector<16x1xf32> to vector<16x128xf32>
    %15 = arith.subf %0, %14 : vector<16x128xf32>
    %cst_5 = arith.constant 9.99999974E-6 : f32
    %16 = vector.broadcast %cst_5 : f32 to vector<16x1xf32>
    %17 = arith.addf %13, %16 : vector<16x1xf32>
    %18 = math.rsqrt %17 : vector<16x1xf32>
    %19 = vector.broadcast %18 : vector<16x1xf32> to vector<16x128xf32>
    %20 = arith.mulf %15, %19 : vector<16x128xf32>
    %c0_6 = arith.constant 0 : index
    %c0_7 = arith.constant 0 : index
    %21 = vector.load %arg3[%c0_6, %c0_7] : memref<128x128xf32, #tpu.memory_space<vmem>>, vector<128x128xf32>
    %cst_8 = arith.constant dense<0.000000e+00> : vector<16x128xf32>
    %22 = tpu.matmul %20, %21, %cst_8 {dimension_numbers = #tpu.dot_dimension_numbers<[1], [0], [0], [1], [0, 0, 1, 1], [], []>} : vector<16x128xf32>, vector<128x128xf32>, vector<16x128xf32> -> vector<16x128xf32>
    %c0_9 = arith.constant 0 : index
    %c0_10 = arith.constant 0 : index
    %23 = vector.load %arg4[%c0_9, %c0_10] : memref<1x128xf32, #tpu.memory_space<vmem>>, vector<1x128xf32>
    %24 = vector.broadcast %23 : vector<1x128xf32> to vector<16x128xf32>
    %25 = arith.addf %22, %24 : vector<16x128xf32>
    %c0_11 = arith.constant 0 : index
    %c0_12 = arith.constant 0 : index
    %26 = vector.load %arg5[%c0_11, %c0_12] : memref<16x128xf32, #tpu.memory_space<vmem>>, vector<16x128xf32>
    tpu.vector_store %arg5[%c0_11, %c0_12], %25 {strides = array<i32>} : memref<16x128xf32, #tpu.memory_space<vmem>>, vector<16x128xf32>,
    return
  }
  func.func @transform_0(%arg0: i32, %arg1: i32) -> (i32, i32) {
    %c0_i32 = arith.constant 0 : i32
    %c0_i32_0 = arith.constant 0 : i32
    return %arg1, %c0_i32 : i32, i32
  }
  func.func @transform_1(%arg0: i32, %arg1: i32) -> (i32, i32) {
    %c0_i32 = arith.constant 0 : i32
    %c0_i32_0 = arith.constant 0 : i32
    return %c0_i32, %arg0 : i32, i32
  }
  func.func @transform_2(%arg0: i32, %arg1: i32) -> (i32, i32) {
    %c0_i32 = arith.constant 0 : i32
    %c0_i32_0 = arith.constant 0 : i32
    return %c0_i32, %arg0 : i32, i32
  }
  func.func @transform_3(%arg0: i32, %arg1: i32) -> (i32, i32) {
    %c0_i32 = arith.constant 0 : i32
    return %arg1, %arg0 : i32, i32
  }
}

</mosaic_0001>

<llo_original>
// kernel: tpu_custom_call.1
$region0: #{tpu_custom_call.1}
  #allocation0 [shape = 'u32[]', space=smem, size = 0x4, offset = 0x4, fixed_abs, tag = 'smem constant byte address 0x4 - core index']
  #allocation1 [shape = 'u32[72,128]{1,0:T(1,128)}', space=vmem, size = 0x9000, scoped, tag = 'internal scratch']
  %s0 = inlined_call_operand.hbm [shape: f32[16,128], index: 0, kind: input, shape index: {}]
  %s1 = inlined_call_operand.hbm [shape: f32[128,128], index: 1, kind: input, shape index: {}]
  %s2 = inlined_call_operand.vmem [shape: f32[1,128], index: 2, kind: input, shape index: {}]
  %s3 = inlined_call_operand.hbm [shape: f32[16,128], index: 3, kind: output, shape index: {}]
  %s4 = sld [smem:[#allocation0]]
  $region30: #{tpu_custom_call.1} parent=0
    _
  %s6 = ssub.s32 1, %s4
  %s7 = scalar_select 0, %s6, %s4
  $region1: #{tpu_custom_call.1} parent=0
    #allocation2 [shape = 'u8[8192]{0}', space=vmem, size = 0x2000, scoped, tag = 'input window, operand 0, single buffered']
    #allocation3 [shape = 's32[1]{0}', space=sflag, size = 0x4, scoped, tag = 'scoped memory for tpu_custom_call.1']
    #allocation4 [shape = 's32[1]{0}', space=sflag, size = 0x4, scoped, tag = 'scoped memory for tpu_custom_call.1']
    #allocation5 [shape = 'u8[65536]{0}', space=vmem, size = 0x10000, scoped, tag = 'input window, operand 1, single buffered']
    #allocation6 [shape = 's32[1]{0}', space=sflag, size = 0x4, scoped, tag = 'scoped memory for tpu_custom_call.1']
    #allocation7 [shape = 'u8[8192]{0}', space=vmem, size = 0x2000, scoped, tag = 'output window, operand 0, single buffered']
    %8 = vsyncpa [#allocation3], 0
    %9 = vsyncpa [#allocation6], 0
    %10 = vsyncpa [#allocation4], 0
    // Predicated region
    $region2: #{tpu_custom_call.1} parent=1 // pred_check
      _
    $region3: #{tpu_custom_call.1} parent=1 // pred_check_branch
      %12 = sbr.rel (0) target = $region5
    $region4: #{tpu_custom_call.1} parent=1 // pred_region
      %14 = vsyncadd [#allocation3], 0
      %s15 = sshll.u32 %s0, 4
      %s16 = int_to_ptr.hbm [resolvable:$true] %s15
      %s17 = sshll.u32 [#allocation2], 4
      %s18 = int_to_ptr.vmem [resolvable:$true] %s17
      %23 = dma.hbm_to_vmem [thread:$0]  %s16, 256, %s18, [#allocation3], 128, 128, 8
    $region5: #{tpu_custom_call.1} parent=1 // pred_fallthru
      _
    // Predicated region
    $region6: #{tpu_custom_call.1} parent=1 // pred_check
      _
    $region7: #{tpu_custom_call.1} parent=1 // pred_check_branch
      %25 = sbr.rel (0) target = $region9
    $region8: #{tpu_custom_call.1} parent=1 // pred_region
      %27 = vsyncadd [#allocation6], 0
      %s28 = sshll.u32 %s1, 4
      %s29 = int_to_ptr.hbm [resolvable:$true] %s28
      %s30 = sshll.u32 [#allocation5], 4
      %s31 = int_to_ptr.vmem [resolvable:$true] %s30
      %36 = dma.hbm_to_vmem [thread:$0]  %s29, 2048, %s31, [#allocation6], 128, 128, 8
    $region9: #{tpu_custom_call.1} parent=1 // pred_fallthru
      _
    // Predicated region
    $region10: #{tpu_custom_call.1} parent=1 // pred_check
      _
    $region11: #{tpu_custom_call.1} parent=1 // pred_check_branch
      %38 = sbr.rel (0) target = $region13
    $region12: #{tpu_custom_call.1} parent=1 // pred_region
      _
    $region13: #{tpu_custom_call.1} parent=1 // pred_fallthru
      _
    // Predicated region
    $region14: #{tpu_custom_call.1} parent=1 // pred_check
      _
    $region15: #{tpu_custom_call.1} parent=1 // pred_check_branch
      %40 = sbr.rel (0) target = $region17
    $region16: #{tpu_custom_call.1} parent=1 // pred_region
      %42 = dma.done [#allocation3], 256
    $region17: #{tpu_custom_call.1} parent=1 // pred_fallthru
      _
    // Predicated region
    $region18: #{tpu_custom_call.1} parent=1 // pred_check
      _
    $region19: #{tpu_custom_call.1} parent=1 // pred_check_branch
      %44 = sbr.rel (0) target = $region21
    $region20: #{tpu_custom_call.1} parent=1 // pred_region
      %46 = dma.done [#allocation6], 2048
    $region21: #{tpu_custom_call.1} parent=1 // pred_fallthru
      _
    %v47 = vld [vmem:[#allocation2] sm:$0xff]
    %v48 = vld [vmem:[#allocation2 + $0x8] sm:$0xff]
    %49 = vadd.xlane.f32.xlu0 %v47
    %v50 = vpop.xlane.xlu0 %49
    %51 = vadd.xlane.f32.xlu0 %v48
    %v52 = vpop.xlane.xlu0 %51
    %v53 = vmul.f32 %v47, %v47
    %v54 = vmul.f32 %v48, %v48
    %55 = vadd.xlane.f32.xlu0 %v53
    %v56 = vpop.xlane.xlu0 %55
    %57 = vadd.xlane.f32.xlu0 %v54
    %v58 = vpop.xlane.xlu0 %57
    %v59 = vmul.f32 %v50, 0.03125
    %v60 = vmul.f32 %v52, 0.03125
    %v61 = vmul.f32 %v56, 0.03125
    %v62 = vmul.f32 %v58, 0.03125
    %v63 = vmul.f32 %v59, %v59
    %v64 = vmul.f32 %v60, %v60
    %v65 = vsub.f32 %v61, %v63
    %v66 = vsub.f32 %v62, %v64
    %v67 = vmax.f32 %v65, 0.0
    %v68 = vmax.f32 %v66, 0.0
    %v69 = vsub.f32 %v47, %v59
    %v70 = vsub.f32 %v48, %v60
    %v71 = vadd.f32 %v67, 1e-05
    %v72 = vadd.f32 %v68, 1e-05
    %v73 = vrsqrt.pop %v71
    %v74 = vmul.f32 %v73, %v71
    %v75 = vmul.f32 %v74, %v73
    %v76 = vmul.f32 0.5, %v75
    %v77 = vsub.f32 1.5, %v76
    %v78 = vmul.f32 %v73, %v77
    %vm79 = vweird.f32 %v71
    %vm80 = vweird.f32 %v73
    %vm81 = vmor %vm79, %vm80
    %v82 = vsel %vm81, %v73, %v78
    %v83 = vrsqrt.pop %v72
    %v84 = vmul.f32 %v83, %v72
    %v85 = vmul.f32 %v84, %v83
    %v86 = vmul.f32 0.5, %v85
    %v87 = vsub.f32 1.5, %v86
    %v88 = vmul.f32 %v83, %v87
    %vm89 = vweird.f32 %v72
    %vm90 = vweird.f32 %v83
    %vm91 = vmor %vm89, %vm90
    %v92 = vsel %vm91, %v83, %v88
    %v93 = vmul.f32 %v69, %v82
    %v94 = vmul.f32 %v70, %v92
    %v95 = vld [vmem:[#allocation5] sm:$0xff]
    %v96 = vld [vmem:[#allocation5 + $0x8] sm:$0xff]
    %v97 = vld [vmem:[#allocation5 + $0x10] sm:$0xff]
    %v98 = vld [vmem:[#allocation5 + $0x18] sm:$0xff]
    %v99 = vld [vmem:[#allocation5 + $0x20] sm:$0xff]
    %v100 = vld [vmem:[#allocation5 + $0x28] sm:$0xff]
    %v101 = vld [vmem:[#allocation5 + $0x30] sm:$0xff]
    %v102 = vld [vmem:[#allocation5 + $0x38] sm:$0xff]
    %v103 = vld [vmem:[#allocation5 + $0x40] sm:$0xff]
    %v104 = vld [vmem:[#allocation5 + $0x48] sm:$0xff]
    %v105 = vld [vmem:[#allocation5 + $0x50] sm:$0xff]
    %v106 = vld [vmem:[#allocation5 + $0x58] sm:$0xff]
    %v107 = vld [vmem:[#allocation5 + $0x60] sm:$0xff]
    %v108 = vld [vmem:[#allocation5 + $0x68] sm:$0xff]
    %v109 = vld [vmem:[#allocation5 + $0x70] sm:$0xff]
    %v110 = vld [vmem:[#allocation5 + $0x78] sm:$0xff]
    %v111 = vld [vmem:[%s2] sm:$0x1]
    %v113 = vperm.slane %v111, 0
    %115 = vmatpush.msra.mxu0 %v110
    %116 = vmatpush.msra.mxu0 %v109
    %117 = vmatpush.msra.mxu0 %v108
    %118 = vmatpush.msra.mxu0 %v107
    %119 = vmatpush.msra.mxu0 %v106
    %120 = vmatpush.msra.mxu0 %v105
    %121 = vmatpush.msra.mxu0 %v104
    %122 = vmatpush.msra.mxu0 %v103
    %123 = vmatpush.msra.mxu0 %v102
    %124 = vmatpush.msra.mxu0 %v101
    %125 = vmatpush.msra.mxu0 %v100
    %126 = vmatpush.msra.mxu0 %v99
    %127 = vmatpush.msra.mxu0 %v98
    %128 = vmatpush.msra.mxu0 %v97
    %129 = vmatpush.msra.mxu0 %v96
    %130 = vmatpush.msra.mxu0 %v95
    %131 = vmatmul.f32.gmra.mxu0 %v93
    %v132 = vpop.f32.mrf.mxu0
    %v133 = vadd.f32 %v113, %v132
    %134 = vmatmul.f32.gmra.mxu0 %v94
    %v135 = vpop.f32.mrf.mxu0
    %v136 = vadd.f32 %v113, %v135
    %137 = vdwg.mxu0
    %138 = vst [vmem:[#allocation7] sm:$0xff] %v133
    %139 = vst [vmem:[#allocation7 + $0x8] sm:$0xff] %v136
    // Predicated region
    $region22: #{tpu_custom_call.1} parent=1 // pred_check
      _
    $region23: #{tpu_custom_call.1} parent=1 // pred_check_branch
      %141 = sbr.rel (0) target = $region25
    $region24: #{tpu_custom_call.1} parent=1 // pred_region
      %143 = vsyncadd [#allocation4], 0
      %s144 = sshll.u32 [#allocation7], 4
      %s145 = int_to_ptr.vmem [resolvable:$true] %s144
      %s146 = sshll.u32 %s3, 4
      %s147 = int_to_ptr.hbm [resolvable:$true] %s146
      %152 = dma.vmem_to_hbm [thread:$0]  %s145, 256, %s147, [#allocation4], 128, 128, 8
    $region25: #{tpu_custom_call.1} parent=1 // pred_fallthru
      _
    // Predicated region
    $region26: #{tpu_custom_call.1} parent=1 // pred_check
      _
    $region27: #{tpu_custom_call.1} parent=1 // pred_check_branch
      %154 = sbr.rel (0) target = $region29
    $region28: #{tpu_custom_call.1} parent=1 // pred_region
      %156 = dma.done [#allocation4], 256
    $region29: #{tpu_custom_call.1} parent=1 // pred_fallthru
      _
    %157 = vsyncpa [#allocation3], 1
    %158 = vsyncpa [#allocation6], 1
    %159 = vsyncpa [#allocation4], 1

</llo_original>
